<compile_context>
chip_gen: v7x
topology: tpu7x:2x2x1
jax: 0.10.0
libtpu: 0.0.40
codegen_flags: <defaults>
</compile_context>

<pallas_src>
import jax
import jax.numpy as jnp
from jax import lax
from jax.experimental import pallas as pl
from jax.experimental.pallas import tpu as pltpu


def linear_kernel(x_ref, w_ref, b_ref, o_ref):
    # x_ref: (tm, K) compute dtype; w_ref: (N, K) compute dtype (torch layout);
    # b_ref: (1, N) f32; o_ref: (tm, N) output dtype.
    acc = lax.dot_general(
        x_ref[...], w_ref[...],
        dimension_numbers=(((1,), (1,)), ((), ())),   # contract K with K
        preferred_element_type=jnp.float32)           # f32 accumulation
    o_ref[...] = (acc + b_ref[...]).astype(o_ref.dtype)


def _round_up(x, mult):
    return ((x + mult - 1) // mult) * mult


def _num_tensorcores():
    """Best-effort TensorCores-per-device (v7x = 2, v5e/v6e = 1)."""
    try:
        info = pltpu.get_tpu_info()
        for attr in ("num_cores", "core_count", "num_tensorcores",
                     "tensorcores_per_chip", "cores_per_chip"):
            v = getattr(info, attr, None)
            if isinstance(v, int) and v > 0:
                return v
    except Exception:
        pass
    try:
        kind = jax.devices()[0].device_kind.lower()
        if "v7" in kind:
            return 2
    except Exception:
        pass
    return 1


def _choose_tm(m, num_cores, compute_itemsize):
    """Pick the M tile size.

    Single-TC chips (v5e/v6e) and small problems: one grid step (whole M) up to
    the tile cap -- the second step buys nothing and costs pipeline overhead.
    Multi-TC chips (v7x) with large M: >= 2 steps per core so the 'parallel' M
    axis megacore-shards while each core still overlaps DMA with compute.
    """
    cap = 4096 if compute_itemsize <= 2 else 2048   # bf16 vs f32 inputs
    if m <= 8:
        return m                                    # full-dim block
    if num_cores <= 1 or m < 1024:
        return m if m <= cap else cap
    tm = _round_up(pl.cdiv(m, 2 * num_cores), 8)    # >= 2 steps per core
    return min(tm, cap)


def pallas_linear(x, weight, bias, *, tm=None, compute_dtype=jnp.bfloat16):
    """x: (B, S, K); weight: (N, K) [PyTorch layout]; bias: (N,).

    compute_dtype: dtype the matmul inputs are cast to (accumulation is always
    f32).  bfloat16 (default) halves HBM traffic at ~1e-2 relative precision;
    pass None for exact f32 end-to-end numerics.
    """
    B, S, K = x.shape
    N = weight.shape[0]
    M = B * S

    out_dtype = x.dtype
    cdt = x.dtype if compute_dtype is None else compute_dtype

    x2d = x.reshape(M, K).astype(cdt)
    w = weight.astype(cdt)
    b2d = bias.astype(jnp.float32).reshape(1, N)

    if tm is None:
        tm = _choose_tm(M, _num_tensorcores(), jnp.dtype(cdt).itemsize)
    grid_m = pl.cdiv(M, tm)

    out2d = pl.pallas_call(
        linear_kernel,
        out_shape=jax.ShapeDtypeStruct((M, N), out_dtype),
        grid_spec=pltpu.PrefetchScalarGridSpec(
            num_scalar_prefetch=0,
            grid=(grid_m,),
            in_specs=[
                pl.BlockSpec((tm, K), lambda i: (i, 0)),   # streamed x tiles
                pl.BlockSpec((N, K), lambda i: (0, 0)),    # weight, VMEM-resident
                pl.BlockSpec((1, N), lambda i: (0, 0)),    # bias, VMEM-resident
            ],
            out_specs=pl.BlockSpec((tm, N), lambda i: (i, 0)),
        ),
        compiler_params=pltpu.CompilerParams(
            dimension_semantics=("parallel",)),
    )(x2d, w, b2d)

    return out2d.reshape(B, S, N)


if __name__ == "__main__":
    # Shapes from the spec: x491 is [1, 384, 256], Linear is 256 -> 256.
    B, S, K, N = 1, 384, 256, 256

    key = jax.random.PRNGKey(0)
    kx, kw, kb = jax.random.split(key, 3)

    x = jax.random.normal(kx, (B, S, K), dtype=jnp.float32)
    # Deterministic synthetic parameters (not loaded from a checkpoint).
    weight = jax.random.normal(kw, (N, K), dtype=jnp.float32) * 0.02
    bias = jax.random.normal(kb, (N,), dtype=jnp.float32) * 0.02

    ref = x @ weight.T + bias   # same semantics as torch.nn.Linear

    # Default (bf16 inputs, f32 accumulation) path.
    out = pallas_linear(x, weight, bias)
    jax.block_until_ready(out)
    assert out.shape == (B, S, N)
    assert jnp.allclose(out, ref, atol=3e-2, rtol=3e-2)   # bf16 precision contract

    # Exact f32 path still matches the reference tightly.
    out_f32 = pallas_linear(x, weight, bias, compute_dtype=None)
    jax.block_until_ready(out_f32)
    assert jnp.allclose(out_f32, ref, atol=1e-4, rtol=1e-4)

    print("KERNEL_OK")
</pallas_src>

<mosaic_0001>
module attributes {stable_mosaic.version = 11 : i64} {
  func.func @linear_kernel(%arg0: i32, %arg1: memref<384x256xbf16, #tpu.memory_space<vmem>>, %arg2: memref<256x256xbf16, #tpu.memory_space<vmem>>, %arg3: memref<1x256xf32, #tpu.memory_space<vmem>>, %arg4: memref<384x256xf32, #tpu.memory_space<vmem>>) attributes {dimension_semantics = [#tpu.dimension_semantics<parallel>], iteration_bounds = array<i64: 1>, scalar_prefetch = 0 : i64, scratch_operands = 0 : i64, tpu.core_type = #tpu.core_type<tc>, window_params = [{transform_indices = @transform_0, window_bounds = array<i64: 384, 256>}, {pipeline_mode = #tpu.pipeline_mode<synchronous>, transform_indices = @transform_1, window_bounds = array<i64: 256, 256>}, {pipeline_mode = #tpu.pipeline_mode<synchronous>, transform_indices = @transform_2, window_bounds = array<i64: 1, 256>}, {transform_indices = @transform_3, window_bounds = array<i64: 384, 256>}]} {
    %c0 = arith.constant 0 : index
    %c0_0 = arith.constant 0 : index
    %0 = vector.load %arg1[%c0, %c0_0] : memref<384x256xbf16, #tpu.memory_space<vmem>>, vector<384x256xbf16>
    %c0_1 = arith.constant 0 : index
    %c0_2 = arith.constant 0 : index
    %1 = vector.load %arg2[%c0_1, %c0_2] : memref<256x256xbf16, #tpu.memory_space<vmem>>, vector<256x256xbf16>
    %cst = arith.constant dense<0.000000e+00> : vector<384x256xf32>
    %2 = tpu.matmul %0, %1, %cst {dimension_numbers = #tpu.dot_dimension_numbers<[1], [1], [0], [0], [0, 0, 1, 0], [], []>} : vector<384x256xbf16>, vector<256x256xbf16>, vector<384x256xf32> -> vector<384x256xf32>
    %c0_3 = arith.constant 0 : index
    %c0_4 = arith.constant 0 : index
    %3 = vector.load %arg3[%c0_3, %c0_4] : memref<1x256xf32, #tpu.memory_space<vmem>>, vector<1x256xf32>
    %4 = vector.broadcast %3 : vector<1x256xf32> to vector<384x256xf32>
    %5 = arith.addf %2, %4 : vector<384x256xf32>
    %c0_5 = arith.constant 0 : index
    %c0_6 = arith.constant 0 : index
    %6 = vector.load %arg4[%c0_5, %c0_6] : memref<384x256xf32, #tpu.memory_space<vmem>>, vector<384x256xf32>
    tpu.vector_store %arg4[%c0_5, %c0_6], %5 {strides = array<i32>} : memref<384x256xf32, #tpu.memory_space<vmem>>, vector<384x256xf32>,
    return
  }
  func.func @transform_0(%arg0: i32) -> (i32, i32) {
    %c0_i32 = arith.constant 0 : i32
    %c0_i32_0 = arith.constant 0 : i32
    return %arg0, %c0_i32 : i32, i32
  }
  func.func @transform_1(%arg0: i32) -> (i32, i32) {
    %c0_i32 = arith.constant 0 : i32
    %c0_i32_0 = arith.constant 0 : i32
    %c0_i32_1 = arith.constant 0 : i32
    return %c0_i32, %c0_i32_0 : i32, i32
  }
  func.func @transform_2(%arg0: i32) -> (i32, i32) {
    %c0_i32 = arith.constant 0 : i32
    %c0_i32_0 = arith.constant 0 : i32
    %c0_i32_1 = arith.constant 0 : i32
    return %c0_i32, %c0_i32_0 : i32, i32
  }
  func.func @transform_3(%arg0: i32) -> (i32, i32) {
    %c0_i32 = arith.constant 0 : i32
    %c0_i32_0 = arith.constant 0 : i32
    return %arg0, %c0_i32 : i32, i32
  }
}

</mosaic_0001>

<llo_original>
// kernel: tpu_custom_call.1
$region0: #{tpu_custom_call.1}
  #allocation0 [shape = 'u32[]', space=smem, size = 0x4, offset = 0x4, fixed_abs, tag = 'smem constant byte address 0x4 - core index']
  #allocation1 [shape = 'u32[144,128]{1,0:T(1,128)}', space=vmem, size = 0x12000, scoped, tag = 'internal scratch']
  %s0 = inlined_call_operand.hbm [shape: bf16[384,256], index: 0, kind: input, shape index: {}]
  %s1 = inlined_call_operand.hbm [shape: bf16[256,256], index: 1, kind: input, shape index: {}]
  %s2 = inlined_call_operand.vmem [shape: f32[1,256], index: 2, kind: input, shape index: {}]
  %s3 = inlined_call_operand.hbm [shape: f32[384,256], index: 3, kind: output, shape index: {}]
  %s4 = sld [smem:[#allocation0]]
  $region30: #{tpu_custom_call.1} parent=0
    _
  %s6 = ssub.s32 1, %s4
  %s7 = scalar_select 0, %s6, %s4
  $region1: #{tpu_custom_call.1} parent=0
    #allocation2 [shape = 'u8[196608]{0}', space=vmem, size = 0x30000, scoped, tag = 'input window, operand 0, single buffered']
    #allocation3 [shape = 's32[1]{0}', space=sflag, size = 0x4, scoped, tag = 'scoped memory for tpu_custom_call.1']
    #allocation4 [shape = 's32[1]{0}', space=sflag, size = 0x4, scoped, tag = 'scoped memory for tpu_custom_call.1']
    #allocation5 [shape = 'u8[131072]{0}', space=vmem, size = 0x20000, scoped, tag = 'input window, operand 1, single buffered']
    #allocation6 [shape = 's32[1]{0}', space=sflag, size = 0x4, scoped, tag = 'scoped memory for tpu_custom_call.1']
    #allocation7 [shape = 'u8[393216]{0}', space=vmem, size = 0x60000, scoped, tag = 'output window, operand 0, single buffered']
    %8 = vsyncpa [#allocation3], 0
    %9 = vsyncpa [#allocation6], 0
    %10 = vsyncpa [#allocation4], 0
    // Predicated region
    $region2: #{tpu_custom_call.1} parent=1 // pred_check
      _
    $region3: #{tpu_custom_call.1} parent=1 // pred_check_branch
      %12 = sbr.rel (0) target = $region5
    $region4: #{tpu_custom_call.1} parent=1 // pred_region
      %s14 = ssub.s32 6144, 6144
      %15 = vsyncadd [#allocation3], %s14
      %s16 = sshll.u32 [#allocation2], 4
      %s17 = int_to_ptr.vmem [resolvable:$true] %s16
      %22 = dma.hbm_to_vmem [thread:$0]  %s0, 6144, %s17, [#allocation3], 128, 128, 8
    $region5: #{tpu_custom_call.1} parent=1 // pred_fallthru
      _
    // Predicated region
    $region6: #{tpu_custom_call.1} parent=1 // pred_check
      _
    $region7: #{tpu_custom_call.1} parent=1 // pred_check_branch
      %24 = sbr.rel (0) target = $region9
    $region8: #{tpu_custom_call.1} parent=1 // pred_region
      %s26 = ssub.s32 4096, 4096
      %27 = vsyncadd [#allocation6], %s26
      %s28 = sshll.u32 [#allocation5], 4
      %s29 = int_to_ptr.vmem [resolvable:$true] %s28
      %34 = dma.hbm_to_vmem [thread:$0]  %s1, 4096, %s29, [#allocation6], 128, 128, 8
    $region9: #{tpu_custom_call.1} parent=1 // pred_fallthru
      _
    // Predicated region
    $region10: #{tpu_custom_call.1} parent=1 // pred_check
      _
    $region11: #{tpu_custom_call.1} parent=1 // pred_check_branch
      %36 = sbr.rel (0) target = $region13
    $region12: #{tpu_custom_call.1} parent=1 // pred_region
      _
    $region13: #{tpu_custom_call.1} parent=1 // pred_fallthru
      _
    // Predicated region
    $region14: #{tpu_custom_call.1} parent=1 // pred_check
      _
    $region15: #{tpu_custom_call.1} parent=1 // pred_check_branch
      %38 = sbr.rel (0) target = $region17
    $region16: #{tpu_custom_call.1} parent=1 // pred_region
      %39 = dma.done [#allocation3], 6144
    $region17: #{tpu_custom_call.1} parent=1 // pred_fallthru
      _
    // Predicated region
    $region18: #{tpu_custom_call.1} parent=1 // pred_check
      _
    $region19: #{tpu_custom_call.1} parent=1 // pred_check_branch
      %41 = sbr.rel (0) target = $region21
    $region20: #{tpu_custom_call.1} parent=1 // pred_region
      %42 = dma.done [#allocation6], 4096
    $region21: #{tpu_custom_call.1} parent=1 // pred_fallthru
      _
    %v43 = vld [vmem:[#allocation2] sm:$0xff]
    %v44 = vld [vmem:[#allocation2 + $0x8] sm:$0xff]
    %v45 = vld [vmem:[#allocation2 + $0x10] sm:$0xff]
    %v46 = vld [vmem:[#allocation2 + $0x18] sm:$0xff]
    %v47 = vld [vmem:[#allocation2 + $0x20] sm:$0xff]
    %v48 = vld [vmem:[#allocation2 + $0x28] sm:$0xff]
    %v49 = vld [vmem:[#allocation2 + $0x30] sm:$0xff]
    %v50 = vld [vmem:[#allocation2 + $0x38] sm:$0xff]
    %v51 = vld [vmem:[#allocation2 + $0x40] sm:$0xff]
    %v52 = vld [vmem:[#allocation2 + $0x48] sm:$0xff]
    %v53 = vld [vmem:[#allocation2 + $0x50] sm:$0xff]
    %v54 = vld [vmem:[#allocation2 + $0x58] sm:$0xff]
    %v55 = vld [vmem:[#allocation2 + $0x60] sm:$0xff]
    %v56 = vld [vmem:[#allocation2 + $0x68] sm:$0xff]
    %v57 = vld [vmem:[#allocation2 + $0x70] sm:$0xff]
    %v58 = vld [vmem:[#allocation2 + $0x78] sm:$0xff]
    %v59 = vld [vmem:[#allocation2 + $0x80] sm:$0xff]
    %v60 = vld [vmem:[#allocation2 + $0x88] sm:$0xff]
    %v61 = vld [vmem:[#allocation2 + $0x90] sm:$0xff]
    %v62 = vld [vmem:[#allocation2 + $0x98] sm:$0xff]
    %v63 = vld [vmem:[#allocation2 + $0xa0] sm:$0xff]
    %v64 = vld [vmem:[#allocation2 + $0xa8] sm:$0xff]
    %v65 = vld [vmem:[#allocation2 + $0xb0] sm:$0xff]
    %v66 = vld [vmem:[#allocation2 + $0xb8] sm:$0xff]
    %v67 = vld [vmem:[#allocation2 + $0xc0] sm:$0xff]
    %v68 = vld [vmem:[#allocation2 + $0xc8] sm:$0xff]
    %v69 = vld [vmem:[#allocation2 + $0xd0] sm:$0xff]
    %v70 = vld [vmem:[#allocation2 + $0xd8] sm:$0xff]
    %v71 = vld [vmem:[#allocation2 + $0xe0] sm:$0xff]
    %v72 = vld [vmem:[#allocation2 + $0xe8] sm:$0xff]
    %v73 = vld [vmem:[#allocation2 + $0xf0] sm:$0xff]
    %v74 = vld [vmem:[#allocation2 + $0xf8] sm:$0xff]
    %v75 = vld [vmem:[#allocation2 + $0x100] sm:$0xff]
    %v76 = vld [vmem:[#allocation2 + $0x108] sm:$0xff]
    %v77 = vld [vmem:[#allocation2 + $0x110] sm:$0xff]
    %v78 = vld [vmem:[#allocation2 + $0x118] sm:$0xff]
    %v79 = vld [vmem:[#allocation2 + $0x120] sm:$0xff]
    %v80 = vld [vmem:[#allocation2 + $0x128] sm:$0xff]
    %v81 = vld [vmem:[#allocation2 + $0x130] sm:$0xff]
    %v82 = vld [vmem:[#allocation2 + $0x138] sm:$0xff]
    %v83 = vld [vmem:[#allocation2 + $0x140] sm:$0xff]
    %v84 = vld [vmem:[#allocation2 + $0x148] sm:$0xff]
    %v85 = vld [vmem:[#allocation2 + $0x150] sm:$0xff]
    %v86 = vld [vmem:[#allocation2 + $0x158] sm:$0xff]
    %v87 = vld [vmem:[#allocation2 + $0x160] sm:$0xff]
    %v88 = vld [vmem:[#allocation2 + $0x168] sm:$0xff]
    %v89 = vld [vmem:[#allocation2 + $0x170] sm:$0xff]
    %v90 = vld [vmem:[#allocation2 + $0x178] sm:$0xff]
    %v91 = vld [vmem:[#allocation5] sm:$0xff]
    %v92 = vld [vmem:[#allocation5 + $0x8] sm:$0xff]
    %v93 = vld [vmem:[#allocation5 + $0x10] sm:$0xff]
    %v94 = vld [vmem:[#allocation5 + $0x18] sm:$0xff]
    %v95 = vld [vmem:[#allocation5 + $0x20] sm:$0xff]
    %v96 = vld [vmem:[#allocation5 + $0x28] sm:$0xff]
    %v97 = vld [vmem:[#allocation5 + $0x30] sm:$0xff]
    %v98 = vld [vmem:[#allocation5 + $0x38] sm:$0xff]
    %v99 = vld [vmem:[#allocation5 + $0x40] sm:$0xff]
    %v100 = vld [vmem:[#allocation5 + $0x48] sm:$0xff]
    %v101 = vld [vmem:[#allocation5 + $0x50] sm:$0xff]
    %v102 = vld [vmem:[#allocation5 + $0x58] sm:$0xff]
    %v103 = vld [vmem:[#allocation5 + $0x60] sm:$0xff]
    %v104 = vld [vmem:[#allocation5 + $0x68] sm:$0xff]
    %v105 = vld [vmem:[#allocation5 + $0x70] sm:$0xff]
    %v106 = vld [vmem:[#allocation5 + $0x78] sm:$0xff]
    %v107 = vld [vmem:[#allocation5 + $0x80] sm:$0xff]
    %v108 = vld [vmem:[#allocation5 + $0x88] sm:$0xff]
    %v109 = vld [vmem:[#allocation5 + $0x90] sm:$0xff]
    %v110 = vld [vmem:[#allocation5 + $0x98] sm:$0xff]
    %v111 = vld [vmem:[#allocation5 + $0xa0] sm:$0xff]
    %v112 = vld [vmem:[#allocation5 + $0xa8] sm:$0xff]
    %v113 = vld [vmem:[#allocation5 + $0xb0] sm:$0xff]
    %v114 = vld [vmem:[#allocation5 + $0xb8] sm:$0xff]
    %v115 = vld [vmem:[#allocation5 + $0xc0] sm:$0xff]
    %v116 = vld [vmem:[#allocation5 + $0xc8] sm:$0xff]
    %v117 = vld [vmem:[#allocation5 + $0xd0] sm:$0xff]
    %v118 = vld [vmem:[#allocation5 + $0xd8] sm:$0xff]
    %v119 = vld [vmem:[#allocation5 + $0xe0] sm:$0xff]
    %v120 = vld [vmem:[#allocation5 + $0xe8] sm:$0xff]
    %v121 = vld [vmem:[#allocation5 + $0xf0] sm:$0xff]
    %v122 = vld [vmem:[#allocation5 + $0xf8] sm:$0xff]
    %v123 = vld [vmem:[%s2] sm:$0x3]
    %v125 = vlaneseq
    %v126 = vshrl.u32 %v125, 7
    %v127 = vsub.s32 0, %v126
    %v128 = vrot.slane %v123, %v127
    %v129 = vlaneseq
    %v130 = vshrl.u32 %v129, 7
    %v131 = vsub.s32 1, %v130
    %v132 = vrot.slane %v123, %v131
    %v183 = vunpack.c.l.b16 %v43
    %v184 = vunpack.c.h.b16 %v43
    %v185 = vunpack.c.l.b16 %v44
    %v186 = vunpack.c.h.b16 %v44
    %v187 = vunpack.c.l.b16 %v45
    %v188 = vunpack.c.h.b16 %v45
    %v189 = vunpack.c.l.b16 %v46
    %v190 = vunpack.c.h.b16 %v46
    %v191 = vunpack.c.l.b16 %v47
    %v192 = vunpack.c.h.b16 %v47
    %v193 = vunpack.c.l.b16 %v48
    %v194 = vunpack.c.h.b16 %v48
    %v195 = vunpack.c.l.b16 %v49
    %v196 = vunpack.c.h.b16 %v49
    %v197 = vunpack.c.l.b16 %v50
    %v198 = vunpack.c.h.b16 %v50
    %v199 = vunpack.c.l.b16 %v51
    %v200 = vunpack.c.h.b16 %v51
    %v201 = vunpack.c.l.b16 %v52
    %v202 = vunpack.c.h.b16 %v52
    %v203 = vunpack.c.l.b16 %v53
    %v204 = vunpack.c.h.b16 %v53
    %v205 = vunpack.c.l.b16 %v54
    %v206 = vunpack.c.h.b16 %v54
    %v207 = vunpack.c.l.b16 %v55
    %v208 = vunpack.c.h.b16 %v55
    %v209 = vunpack.c.l.b16 %v56
    %v210 = vunpack.c.h.b16 %v56
    %v211 = vunpack.c.l.b16 %v57
    %v212 = vunpack.c.h.b16 %v57
    %v213 = vunpack.c.l.b16 %v58
    %v214 = vunpack.c.h.b16 %v58
    %v215 = vunpack.c.l.b16 %v59
    %v216 = vunpack.c.h.b16 %v59
    %v217 = vunpack.c.l.b16 %v60
    %v218 = vunpack.c.h.b16 %v60
    %v219 = vunpack.c.l.b16 %v61
    %v220 = vunpack.c.h.b16 %v61
    %v221 = vunpack.c.l.b16 %v62
    %v222 = vunpack.c.h.b16 %v62
    %v223 = vunpack.c.l.b16 %v63
    %v224 = vunpack.c.h.b16 %v63
    %v225 = vunpack.c.l.b16 %v64
    %v226 = vunpack.c.h.b16 %v64
    %v227 = vunpack.c.l.b16 %v65
    %v228 = vunpack.c.h.b16 %v65
    %v229 = vunpack.c.l.b16 %v66
    %v230 = vunpack.c.h.b16 %v66
    %v231 = vunpack.c.l.b16 %v67
    %v232 = vunpack.c.h.b16 %v67
    %v233 = vunpack.c.l.b16 %v68
    %v234 = vunpack.c.h.b16 %v68
    %v235 = vunpack.c.l.b16 %v69
    %v236 = vunpack.c.h.b16 %v69
    %v237 = vunpack.c.l.b16 %v70
    %v238 = vunpack.c.h.b16 %v70
    %v239 = vunpack.c.l.b16 %v71
    %v240 = vunpack.c.h.b16 %v71
    %v241 = vunpack.c.l.b16 %v72
    %v242 = vunpack.c.h.b16 %v72
    %v243 = vunpack.c.l.b16 %v73
    %v244 = vunpack.c.h.b16 %v73
    %v245 = vunpack.c.l.b16 %v74
    %v246 = vunpack.c.h.b16 %v74
    %v247 = vunpack.c.l.b16 %v75
    %v248 = vunpack.c.h.b16 %v75
    %v249 = vunpack.c.l.b16 %v76
    %v250 = vunpack.c.h.b16 %v76
    %v251 = vunpack.c.l.b16 %v77
    %v252 = vunpack.c.h.b16 %v77
    %v253 = vunpack.c.l.b16 %v78
    %v254 = vunpack.c.h.b16 %v78
    %v255 = vunpack.c.l.b16 %v79
    %v256 = vunpack.c.h.b16 %v79
    %v257 = vunpack.c.l.b16 %v80
    %v258 = vunpack.c.h.b16 %v80
    %v259 = vunpack.c.l.b16 %v81
    %v260 = vunpack.c.h.b16 %v81
    %v261 = vunpack.c.l.b16 %v82
    %v262 = vunpack.c.h.b16 %v82
    %v263 = vunpack.c.l.b16 %v83
    %v264 = vunpack.c.h.b16 %v83
    %v265 = vunpack.c.l.b16 %v84
    %v266 = vunpack.c.h.b16 %v84
    %v267 = vunpack.c.l.b16 %v85
    %v268 = vunpack.c.h.b16 %v85
    %v269 = vunpack.c.l.b16 %v86
    %v270 = vunpack.c.h.b16 %v86
    %v271 = vunpack.c.l.b16 %v87
    %v272 = vunpack.c.h.b16 %v87
    %v273 = vunpack.c.l.b16 %v88
    %v274 = vunpack.c.h.b16 %v88
    %v275 = vunpack.c.l.b16 %v89
    %v276 = vunpack.c.h.b16 %v89
    %v277 = vunpack.c.l.b16 %v90
    %v278 = vunpack.c.h.b16 %v90
    %v279 = vpack.c.b16 %v185, %v183
    %v280 = vpack.c.b16 %v186, %v184
    %v281 = vpack.c.b16 %v189, %v187
    %v282 = vpack.c.b16 %v190, %v188
    %v283 = vpack.c.b16 %v193, %v191
    %v284 = vpack.c.b16 %v194, %v192
    %v285 = vpack.c.b16 %v197, %v195
    %v286 = vpack.c.b16 %v198, %v196
    %v287 = vpack.c.b16 %v201, %v199
    %v288 = vpack.c.b16 %v202, %v200
    %v289 = vpack.c.b16 %v205, %v203
    %v290 = vpack.c.b16 %v206, %v204
    %v291 = vpack.c.b16 %v209, %v207
    %v292 = vpack.c.b16 %v210, %v208
    %v293 = vpack.c.b16 %v213, %v211
    %v294 = vpack.c.b16 %v214, %v212
    %v295 = vpack.c.b16 %v217, %v215
    %v296 = vpack.c.b16 %v218, %v216
    %v297 = vpack.c.b16 %v221, %v219
    %v298 = vpack.c.b16 %v222, %v220
    %v299 = vpack.c.b16 %v225, %v223
    %v300 = vpack.c.b16 %v226, %v224
    %v301 = vpack.c.b16 %v229, %v227
    %v302 = vpack.c.b16 %v230, %v228
    %v303 = vpack.c.b16 %v233, %v231
    %v304 = vpack.c.b16 %v234, %v232
    %v305 = vpack.c.b16 %v237, %v235
    %v306 = vpack.c.b16 %v238, %v236
    %v307 = vpack.c.b16 %v241, %v239
    %v308 = vpack.c.b16 %v242, %v240
    %v309 = vpack.c.b16 %v245, %v243
    %v310 = vpack.c.b16 %v246, %v244
    %v311 = vpack.c.b16 %v249, %v247
    %v312 = vpack.c.b16 %v250, %v248
    %v313 = vpack.c.b16 %v253, %v251
    %v314 = vpack.c.b16 %v254, %v252
    %v315 = vpack.c.b16 %v257, %v255
    %v316 = vpack.c.b16 %v258, %v256
    %v317 = vpack.c.b16 %v261, %v259
    %v318 = vpack.c.b16 %v262, %v260
    %v319 = vpack.c.b16 %v265, %v263
    %v320 = vpack.c.b16 %v266, %v264
    %v321 = vpack.c.b16 %v269, %v267
    %v322 = vpack.c.b16 %v270, %v268
    %v323 = vpack.c.b16 %v273, %v271
    %v324 = vpack.c.b16 %v274, %v272
    %v325 = vpack.c.b16 %v277, %v275
    %v326 = vpack.c.b16 %v278, %v276
    %v407 = vunpack.c.l.b16 %v91
    %v408 = vunpack.c.h.b16 %v91
    %v409 = vunpack.c.l.b16 %v92
    %v410 = vunpack.c.h.b16 %v92
    %v411 = vunpack.c.l.b16 %v93
    %v412 = vunpack.c.h.b16 %v93
    %v413 = vunpack.c.l.b16 %v94
    %v414 = vunpack.c.h.b16 %v94
    %v415 = vunpack.c.l.b16 %v95
    %v416 = vunpack.c.h.b16 %v95
    %v417 = vunpack.c.l.b16 %v96
    %v418 = vunpack.c.h.b16 %v96
    %v419 = vunpack.c.l.b16 %v97
    %v420 = vunpack.c.h.b16 %v97
    %v421 = vunpack.c.l.b16 %v98
    %v422 = vunpack.c.h.b16 %v98
    %v423 = vunpack.c.l.b16 %v99
    %v424 = vunpack.c.h.b16 %v99
    %v425 = vunpack.c.l.b16 %v100
    %v426 = vunpack.c.h.b16 %v100
    %v427 = vunpack.c.l.b16 %v101
    %v428 = vunpack.c.h.b16 %v101
    %v429 = vunpack.c.l.b16 %v102
    %v430 = vunpack.c.h.b16 %v102
    %v431 = vunpack.c.l.b16 %v103
    %v432 = vunpack.c.h.b16 %v103
    %v433 = vunpack.c.l.b16 %v104
    %v434 = vunpack.c.h.b16 %v104
    %v435 = vunpack.c.l.b16 %v105
    %v436 = vunpack.c.h.b16 %v105
    %v437 = vunpack.c.l.b16 %v106
    %v438 = vunpack.c.h.b16 %v106
    %v439 = vunpack.c.l.b16 %v107
    %v440 = vunpack.c.h.b16 %v107
    %v441 = vunpack.c.l.b16 %v108
    %v442 = vunpack.c.h.b16 %v108
    %v443 = vunpack.c.l.b16 %v109
    %v444 = vunpack.c.h.b16 %v109
    %v445 = vunpack.c.l.b16 %v110
    %v446 = vunpack.c.h.b16 %v110
    %v447 = vunpack.c.l.b16 %v111
    %v448 = vunpack.c.h.b16 %v111
    %v449 = vunpack.c.l.b16 %v112
    %v450 = vunpack.c.h.b16 %v112
    %v451 = vunpack.c.l.b16 %v113
    %v452 = vunpack.c.h.b16 %v113
    %v453 = vunpack.c.l.b16 %v114
    %v454 = vunpack.c.h.b16 %v114
    %v455 = vunpack.c.l.b16 %v115
    %v456 = vunpack.c.h.b16 %v115
    %v457 = vunpack.c.l.b16 %v116
    %v458 = vunpack.c.h.b16 %v116
    %v459 = vunpack.c.l.b16 %v117
    %v460 = vunpack.c.h.b16 %v117
    %v461 = vunpack.c.l.b16 %v118
    %v462 = vunpack.c.h.b16 %v118
    %v463 = vunpack.c.l.b16 %v119
    %v464 = vunpack.c.h.b16 %v119
    %v465 = vunpack.c.l.b16 %v120
    %v466 = vunpack.c.h.b16 %v120
    %v467 = vunpack.c.l.b16 %v121
    %v468 = vunpack.c.h.b16 %v121
    %v469 = vunpack.c.l.b16 %v122
    %v470 = vunpack.c.h.b16 %v122
    %v471 = vpack.c.b16 %v409, %v407
    %v472 = vpack.c.b16 %v410, %v408
    %v473 = vpack.c.b16 %v413, %v411
    %v474 = vpack.c.b16 %v414, %v412
    %v475 = vpack.c.b16 %v417, %v415
    %v476 = vpack.c.b16 %v418, %v416
    %v477 = vpack.c.b16 %v421, %v419
    %v478 = vpack.c.b16 %v422, %v420
    %v479 = vpack.c.b16 %v425, %v423
    %v480 = vpack.c.b16 %v426, %v424
    %v481 = vpack.c.b16 %v429, %v427
    %v482 = vpack.c.b16 %v430, %v428
    %v483 = vpack.c.b16 %v433, %v431
    %v484 = vpack.c.b16 %v434, %v432
    %v485 = vpack.c.b16 %v437, %v435
    %v486 = vpack.c.b16 %v438, %v436
    %v487 = vpack.c.b16 %v441, %v439
    %v488 = vpack.c.b16 %v442, %v440
    %v489 = vpack.c.b16 %v445, %v443
    %v490 = vpack.c.b16 %v446, %v444
    %v491 = vpack.c.b16 %v449, %v447
    %v492 = vpack.c.b16 %v450, %v448
    %v493 = vpack.c.b16 %v453, %v451
    %v494 = vpack.c.b16 %v454, %v452
    %v495 = vpack.c.b16 %v457, %v455
    %v496 = vpack.c.b16 %v458, %v456
    %v497 = vpack.c.b16 %v461, %v459
    %v498 = vpack.c.b16 %v462, %v460
    %v499 = vpack.c.b16 %v465, %v463
    %v500 = vpack.c.b16 %v466, %v464
    %v501 = vpack.c.b16 %v469, %v467
    %v502 = vpack.c.b16 %v470, %v468
    %535 = vmatprep.subr.bf16.mxu0 %v472
    %536 = vmatpush1.bf16.xpose.msra.mxu0 %v471
    %537 = vmatprep.subr.bf16.mxu0 %v474
    %538 = vmatpush1.bf16.xpose.msra.mxu0 %v473
    %539 = vmatprep.subr.bf16.mxu0 %v476
    %540 = vmatpush1.bf16.xpose.msra.mxu0 %v475
    %541 = vmatprep.subr.bf16.mxu0 %v478
    %542 = vmatpush1.bf16.xpose.msra.mxu0 %v477
    %543 = vmatprep.subr.bf16.mxu0 %v480
    %544 = vmatpush1.bf16.xpose.msra.mxu0 %v479
    %545 = vmatprep.subr.bf16.mxu0 %v482
    %546 = vmatpush1.bf16.xpose.msra.mxu0 %v481
    %547 = vmatprep.subr.bf16.mxu0 %v484
    %548 = vmatpush1.bf16.xpose.msra.mxu0 %v483
    %549 = vmatprep.subr.bf16.mxu0 %v486
    %550 = vmatpush1.bf16.xpose.msra.mxu0 %v485
    %551 = vmatprep.subr.bf16.mxu0 %v488
    %552 = vmatpush1.bf16.xpose.msra.mxu0 %v487
    %553 = vmatprep.subr.bf16.mxu0 %v490
    %554 = vmatpush1.bf16.xpose.msra.mxu0 %v489
    %555 = vmatprep.subr.bf16.mxu0 %v492
    %556 = vmatpush1.bf16.xpose.msra.mxu0 %v491
    %557 = vmatprep.subr.bf16.mxu0 %v494
    %558 = vmatpush1.bf16.xpose.msra.mxu0 %v493
    %559 = vmatprep.subr.bf16.mxu0 %v496
    %560 = vmatpush1.bf16.xpose.msra.mxu0 %v495
    %561 = vmatprep.subr.bf16.mxu0 %v498
    %562 = vmatpush1.bf16.xpose.msra.mxu0 %v497
    %563 = vmatprep.subr.bf16.mxu0 %v500
    %564 = vmatpush1.bf16.xpose.msra.mxu0 %v499
    %565 = vmatprep.subr.bf16.mxu0 %v502
    %566 = vmatpush1.bf16.xpose.msra.mxu0 %v501
    %567 = vmatprep.mubr.bf16.mxu0 %v280
    %568 = vmatmul.mubr.bf16.gmra.mrb[0].mxu0 %v279
    %v569 = vpop.f32.mrb[0].mxu0
    %v570 = vadd.f32 %v128, %v569
    %v571 = vpop.f32.mrb[0].mxu0
    %v572 = vadd.f32 %v132, %v571
    %v573 = vpop.f32.mrb[0].mxu0
    %v574 = vadd.f32 %v128, %v573
    %v575 = vpop.f32.mrb[0].mxu0
    %v576 = vadd.f32 %v132, %v575
    %577 = vmatprep.mubr.bf16.mxu0 %v282
    %578 = vmatmul.mubr.bf16.gmra.mrb[0].mxu0 %v281
    %v579 = vpop.f32.mrb[0].mxu0
    %v580 = vadd.f32 %v128, %v579
    %v581 = vpop.f32.mrb[0].mxu0
    %v582 = vadd.f32 %v132, %v581
    %v583 = vpop.f32.mrb[0].mxu0
    %v584 = vadd.f32 %v128, %v583
    %v585 = vpop.f32.mrb[0].mxu0
    %v586 = vadd.f32 %v132, %v585
    %587 = vmatprep.mubr.bf16.mxu0 %v284
    %588 = vmatmul.mubr.bf16.gmra.mrb[0].mxu0 %v283
    %v589 = vpop.f32.mrb[0].mxu0
    %v590 = vadd.f32 %v128, %v589
    %v591 = vpop.f32.mrb[0].mxu0
    %v592 = vadd.f32 %v132, %v591
    %v593 = vpop.f32.mrb[0].mxu0
    %v594 = vadd.f32 %v128, %v593
    %v595 = vpop.f32.mrb[0].mxu0
    %v596 = vadd.f32 %v132, %v595
    %597 = vmatprep.mubr.bf16.mxu0 %v286
    %598 = vmatmul.mubr.bf16.gmra.mrb[0].mxu0 %v285
    %v599 = vpop.f32.mrb[0].mxu0
    %v600 = vadd.f32 %v128, %v599
    %v601 = vpop.f32.mrb[0].mxu0
    %v602 = vadd.f32 %v132, %v601
    %v603 = vpop.f32.mrb[0].mxu0
    %v604 = vadd.f32 %v128, %v603
    %v605 = vpop.f32.mrb[0].mxu0
    %v606 = vadd.f32 %v132, %v605
    %607 = vmatprep.mubr.bf16.mxu0 %v288
    %608 = vmatmul.mubr.bf16.gmra.mrb[0].mxu0 %v287
    %v609 = vpop.f32.mrb[0].mxu0
    %v610 = vadd.f32 %v128, %v609
    %v611 = vpop.f32.mrb[0].mxu0
    %v612 = vadd.f32 %v132, %v611
    %v613 = vpop.f32.mrb[0].mxu0
    %v614 = vadd.f32 %v128, %v613
    %v615 = vpop.f32.mrb[0].mxu0
    %v616 = vadd.f32 %v132, %v615
    %617 = vmatprep.mubr.bf16.mxu0 %v290
    %618 = vmatmul.mubr.bf16.gmra.mrb[0].mxu0 %v289
    %v619 = vpop.f32.mrb[0].mxu0
    %v620 = vadd.f32 %v128, %v619
    %v621 = vpop.f32.mrb[0].mxu0
    %v622 = vadd.f32 %v132, %v621
    %v623 = vpop.f32.mrb[0].mxu0
    %v624 = vadd.f32 %v128, %v623
    %v625 = vpop.f32.mrb[0].mxu0
    %v626 = vadd.f32 %v132, %v625
    %627 = vmatprep.mubr.bf16.mxu0 %v292
    %628 = vmatmul.mubr.bf16.gmra.mrb[0].mxu0 %v291
    %v629 = vpop.f32.mrb[0].mxu0
    %v630 = vadd.f32 %v128, %v629
    %v631 = vpop.f32.mrb[0].mxu0
    %v632 = vadd.f32 %v132, %v631
    %v633 = vpop.f32.mrb[0].mxu0
    %v634 = vadd.f32 %v128, %v633
    %v635 = vpop.f32.mrb[0].mxu0
    %v636 = vadd.f32 %v132, %v635
    %637 = vmatprep.mubr.bf16.mxu0 %v294
    %638 = vmatmul.mubr.bf16.gmra.mrb[0].mxu0 %v293
    %v639 = vpop.f32.mrb[0].mxu0
    %v640 = vadd.f32 %v128, %v639
    %v641 = vpop.f32.mrb[0].mxu0
    %v642 = vadd.f32 %v132, %v641
    %v643 = vpop.f32.mrb[0].mxu0
    %v644 = vadd.f32 %v128, %v643
    %v645 = vpop.f32.mrb[0].mxu0
    %v646 = vadd.f32 %v132, %v645
    %647 = vmatprep.mubr.bf16.mxu0 %v296
    %648 = vmatmul.mubr.bf16.gmra.mrb[0].mxu0 %v295
    %v649 = vpop.f32.mrb[0].mxu0
    %v650 = vadd.f32 %v128, %v649
    %v651 = vpop.f32.mrb[0].mxu0
    %v652 = vadd.f32 %v132, %v651
    %v653 = vpop.f32.mrb[0].mxu0
    %v654 = vadd.f32 %v128, %v653
    %v655 = vpop.f32.mrb[0].mxu0
    %v656 = vadd.f32 %v132, %v655
    %657 = vmatprep.mubr.bf16.mxu0 %v298
    %658 = vmatmul.mubr.bf16.gmra.mrb[0].mxu0 %v297
    %v659 = vpop.f32.mrb[0].mxu0
    %v660 = vadd.f32 %v128, %v659
    %v661 = vpop.f32.mrb[0].mxu0
    %v662 = vadd.f32 %v132, %v661
    %v663 = vpop.f32.mrb[0].mxu0
    %v664 = vadd.f32 %v128, %v663
    %v665 = vpop.f32.mrb[0].mxu0
    %v666 = vadd.f32 %v132, %v665
    %667 = vmatprep.mubr.bf16.mxu0 %v300
    %668 = vmatmul.mubr.bf16.gmra.mrb[0].mxu0 %v299
    %v669 = vpop.f32.mrb[0].mxu0
    %v670 = vadd.f32 %v128, %v669
    %v671 = vpop.f32.mrb[0].mxu0
    %v672 = vadd.f32 %v132, %v671
    %v673 = vpop.f32.mrb[0].mxu0
    %v674 = vadd.f32 %v128, %v673
    %v675 = vpop.f32.mrb[0].mxu0
    %v676 = vadd.f32 %v132, %v675
    %677 = vmatprep.mubr.bf16.mxu0 %v302
    %678 = vmatmul.mubr.bf16.gmra.mrb[0].mxu0 %v301
    %v679 = vpop.f32.mrb[0].mxu0
    %v680 = vadd.f32 %v128, %v679
    %v681 = vpop.f32.mrb[0].mxu0
    %v682 = vadd.f32 %v132, %v681
    %v683 = vpop.f32.mrb[0].mxu0
    %v684 = vadd.f32 %v128, %v683
    %v685 = vpop.f32.mrb[0].mxu0
    %v686 = vadd.f32 %v132, %v685
    %687 = vmatprep.mubr.bf16.mxu0 %v304
    %688 = vmatmul.mubr.bf16.gmra.mrb[0].mxu0 %v303
    %v689 = vpop.f32.mrb[0].mxu0
    %v690 = vadd.f32 %v128, %v689
    %v691 = vpop.f32.mrb[0].mxu0
    %v692 = vadd.f32 %v132, %v691
    %v693 = vpop.f32.mrb[0].mxu0
    %v694 = vadd.f32 %v128, %v693
    %v695 = vpop.f32.mrb[0].mxu0
    %v696 = vadd.f32 %v132, %v695
    %697 = vmatprep.mubr.bf16.mxu0 %v306
    %698 = vmatmul.mubr.bf16.gmra.mrb[0].mxu0 %v305
    %v699 = vpop.f32.mrb[0].mxu0
    %v700 = vadd.f32 %v128, %v699
    %v701 = vpop.f32.mrb[0].mxu0
    %v702 = vadd.f32 %v132, %v701
    %v703 = vpop.f32.mrb[0].mxu0
    %v704 = vadd.f32 %v128, %v703
    %v705 = vpop.f32.mrb[0].mxu0
    %v706 = vadd.f32 %v132, %v705
    %707 = vmatprep.mubr.bf16.mxu0 %v308
    %708 = vmatmul.mubr.bf16.gmra.mrb[0].mxu0 %v307
    %v709 = vpop.f32.mrb[0].mxu0
    %v710 = vadd.f32 %v128, %v709
    %v711 = vpop.f32.mrb[0].mxu0
    %v712 = vadd.f32 %v132, %v711
    %v713 = vpop.f32.mrb[0].mxu0
    %v714 = vadd.f32 %v128, %v713
    %v715 = vpop.f32.mrb[0].mxu0
    %v716 = vadd.f32 %v132, %v715
    %717 = vmatprep.mubr.bf16.mxu0 %v310
    %718 = vmatmul.mubr.bf16.gmra.mrb[0].mxu0 %v309
    %v719 = vpop.f32.mrb[0].mxu0
    %v720 = vadd.f32 %v128, %v719
    %v721 = vpop.f32.mrb[0].mxu0
    %v722 = vadd.f32 %v132, %v721
    %v723 = vpop.f32.mrb[0].mxu0
    %v724 = vadd.f32 %v128, %v723
    %v725 = vpop.f32.mrb[0].mxu0
    %v726 = vadd.f32 %v132, %v725
    %727 = vmatprep.mubr.bf16.mxu0 %v312
    %728 = vmatmul.mubr.bf16.gmra.mrb[0].mxu0 %v311
    %v729 = vpop.f32.mrb[0].mxu0
    %v730 = vadd.f32 %v128, %v729
    %v731 = vpop.f32.mrb[0].mxu0
    %v732 = vadd.f32 %v132, %v731
    %v733 = vpop.f32.mrb[0].mxu0
    %v734 = vadd.f32 %v128, %v733
    %v735 = vpop.f32.mrb[0].mxu0
    %v736 = vadd.f32 %v132, %v735
    %737 = vmatprep.mubr.bf16.mxu0 %v314
    %738 = vmatmul.mubr.bf16.gmra.mrb[0].mxu0 %v313
    %v739 = vpop.f32.mrb[0].mxu0
    %v740 = vadd.f32 %v128, %v739
    %v741 = vpop.f32.mrb[0].mxu0
    %v742 = vadd.f32 %v132, %v741
    %v743 = vpop.f32.mrb[0].mxu0
    %v744 = vadd.f32 %v128, %v743
    %v745 = vpop.f32.mrb[0].mxu0
    %v746 = vadd.f32 %v132, %v745
    %747 = vmatprep.mubr.bf16.mxu0 %v316
    %748 = vmatmul.mubr.bf16.gmra.mrb[0].mxu0 %v315
    %v749 = vpop.f32.mrb[0].mxu0
    %v750 = vadd.f32 %v128, %v749
    %v751 = vpop.f32.mrb[0].mxu0
    %v752 = vadd.f32 %v132, %v751
    %v753 = vpop.f32.mrb[0].mxu0
    %v754 = vadd.f32 %v128, %v753
    %v755 = vpop.f32.mrb[0].mxu0
    %v756 = vadd.f32 %v132, %v755
    %757 = vmatprep.mubr.bf16.mxu0 %v318
    %758 = vmatmul.mubr.bf16.gmra.mrb[0].mxu0 %v317
    %v759 = vpop.f32.mrb[0].mxu0
    %v760 = vadd.f32 %v128, %v759
    %v761 = vpop.f32.mrb[0].mxu0
    %v762 = vadd.f32 %v132, %v761
    %v763 = vpop.f32.mrb[0].mxu0
    %v764 = vadd.f32 %v128, %v763
    %v765 = vpop.f32.mrb[0].mxu0
    %v766 = vadd.f32 %v132, %v765
    %767 = vmatprep.mubr.bf16.mxu0 %v320
    %768 = vmatmul.mubr.bf16.gmra.mrb[0].mxu0 %v319
    %v769 = vpop.f32.mrb[0].mxu0
    %v770 = vadd.f32 %v128, %v769
    %v771 = vpop.f32.mrb[0].mxu0
    %v772 = vadd.f32 %v132, %v771
    %v773 = vpop.f32.mrb[0].mxu0
    %v774 = vadd.f32 %v128, %v773
    %v775 = vpop.f32.mrb[0].mxu0
    %v776 = vadd.f32 %v132, %v775
    %777 = vmatprep.mubr.bf16.mxu0 %v322
    %778 = vmatmul.mubr.bf16.gmra.mrb[0].mxu0 %v321
    %v779 = vpop.f32.mrb[0].mxu0
    %v780 = vadd.f32 %v128, %v779
    %v781 = vpop.f32.mrb[0].mxu0
    %v782 = vadd.f32 %v132, %v781
    %v783 = vpop.f32.mrb[0].mxu0
    %v784 = vadd.f32 %v128, %v783
    %v785 = vpop.f32.mrb[0].mxu0
    %v786 = vadd.f32 %v132, %v785
    %787 = vmatprep.mubr.bf16.mxu0 %v324
    %788 = vmatmul.mubr.bf16.gmra.mrb[0].mxu0 %v323
    %v789 = vpop.f32.mrb[0].mxu0
    %v790 = vadd.f32 %v128, %v789
    %v791 = vpop.f32.mrb[0].mxu0
    %v792 = vadd.f32 %v132, %v791
    %v793 = vpop.f32.mrb[0].mxu0
    %v794 = vadd.f32 %v128, %v793
    %v795 = vpop.f32.mrb[0].mxu0
    %v796 = vadd.f32 %v132, %v795
    %797 = vmatprep.mubr.bf16.mxu0 %v326
    %798 = vmatmul.mubr.bf16.gmra.mrb[0].mxu0 %v325
    %v799 = vpop.f32.mrb[0].mxu0
    %v800 = vadd.f32 %v128, %v799
    %v801 = vpop.f32.mrb[0].mxu0
    %v802 = vadd.f32 %v132, %v801
    %v803 = vpop.f32.mrb[0].mxu0
    %v804 = vadd.f32 %v128, %v803
    %v805 = vpop.f32.mrb[0].mxu0
    %v806 = vadd.f32 %v132, %v805
    %807 = vdwg.mxu0
    %808 = vst [vmem:[#allocation7] sm:$0xff] %v570
    %809 = vst [vmem:[#allocation7 + $0x8] sm:$0xff] %v572
    %810 = vst [vmem:[#allocation7 + $0x10] sm:$0xff] %v574
    %811 = vst [vmem:[#allocation7 + $0x18] sm:$0xff] %v576
    %812 = vst [vmem:[#allocation7 + $0x20] sm:$0xff] %v580
    %813 = vst [vmem:[#allocation7 + $0x28] sm:$0xff] %v582
    %814 = vst [vmem:[#allocation7 + $0x30] sm:$0xff] %v584
    %815 = vst [vmem:[#allocation7 + $0x38] sm:$0xff] %v586
    %816 = vst [vmem:[#allocation7 + $0x40] sm:$0xff] %v590
    %817 = vst [vmem:[#allocation7 + $0x48] sm:$0xff] %v592
    %818 = vst [vmem:[#allocation7 + $0x50] sm:$0xff] %v594
    %819 = vst [vmem:[#allocation7 + $0x58] sm:$0xff] %v596
    %820 = vst [vmem:[#allocation7 + $0x60] sm:$0xff] %v600
    %821 = vst [vmem:[#allocation7 + $0x68] sm:$0xff] %v602
    %822 = vst [vmem:[#allocation7 + $0x70] sm:$0xff] %v604
    %823 = vst [vmem:[#allocation7 + $0x78] sm:$0xff] %v606
    %824 = vst [vmem:[#allocation7 + $0x80] sm:$0xff] %v610
    %825 = vst [vmem:[#allocation7 + $0x88] sm:$0xff] %v612
    %826 = vst [vmem:[#allocation7 + $0x90] sm:$0xff] %v614
    %827 = vst [vmem:[#allocation7 + $0x98] sm:$0xff] %v616
    %828 = vst [vmem:[#allocation7 + $0xa0] sm:$0xff] %v620
    %829 = vst [vmem:[#allocation7 + $0xa8] sm:$0xff] %v622
    %830 = vst [vmem:[#allocation7 + $0xb0] sm:$0xff] %v624
    %831 = vst [vmem:[#allocation7 + $0xb8] sm:$0xff] %v626
    %832 = vst [vmem:[#allocation7 + $0xc0] sm:$0xff] %v630
    %833 = vst [vmem:[#allocation7 + $0xc8] sm:$0xff] %v632
    %834 = vst [vmem:[#allocation7 + $0xd0] sm:$0xff] %v634
    %835 = vst [vmem:[#allocation7 + $0xd8] sm:$0xff] %v636
    %836 = vst [vmem:[#allocation7 + $0xe0] sm:$0xff] %v640
    %837 = vst [vmem:[#allocation7 + $0xe8] sm:$0xff] %v642
    %838 = vst [vmem:[#allocation7 + $0xf0] sm:$0xff] %v644
    %839 = vst [vmem:[#allocation7 + $0xf8] sm:$0xff] %v646
    %840 = vst [vmem:[#allocation7 + $0x100] sm:$0xff] %v650
    %841 = vst [vmem:[#allocation7 + $0x108] sm:$0xff] %v652
    %842 = vst [vmem:[#allocation7 + $0x110] sm:$0xff] %v654
    %843 = vst [vmem:[#allocation7 + $0x118] sm:$0xff] %v656
    %844 = vst [vmem:[#allocation7 + $0x120] sm:$0xff] %v660
    %845 = vst [vmem:[#allocation7 + $0x128] sm:$0xff] %v662
    %846 = vst [vmem:[#allocation7 + $0x130] sm:$0xff] %v664
    %847 = vst [vmem:[#allocation7 + $0x138] sm:$0xff] %v666
    %848 = vst [vmem:[#allocation7 + $0x140] sm:$0xff] %v670
    %849 = vst [vmem:[#allocation7 + $0x148] sm:$0xff] %v672
    %850 = vst [vmem:[#allocation7 + $0x150] sm:$0xff] %v674
    %851 = vst [vmem:[#allocation7 + $0x158] sm:$0xff] %v676
    %852 = vst [vmem:[#allocation7 + $0x160] sm:$0xff] %v680
    %853 = vst [vmem:[#allocation7 + $0x168] sm:$0xff] %v682
    %854 = vst [vmem:[#allocation7 + $0x170] sm:$0xff] %v684
    %855 = vst [vmem:[#allocation7 + $0x178] sm:$0xff] %v686
    %856 = vst [vmem:[#allocation7 + $0x180] sm:$0xff] %v690
    %857 = vst [vmem:[#allocation7 + $0x188] sm:$0xff] %v692
    %858 = vst [vmem:[#allocation7 + $0x190] sm:$0xff] %v694
    %859 = vst [vmem:[#allocation7 + $0x198] sm:$0xff] %v696
    %860 = vst [vmem:[#allocation7 + $0x1a0] sm:$0xff] %v700
    %861 = vst [vmem:[#allocation7 + $0x1a8] sm:$0xff] %v702
    %862 = vst [vmem:[#allocation7 + $0x1b0] sm:$0xff] %v704
    %863 = vst [vmem:[#allocation7 + $0x1b8] sm:$0xff] %v706
    %864 = vst [vmem:[#allocation7 + $0x1c0] sm:$0xff] %v710
    %865 = vst [vmem:[#allocation7 + $0x1c8] sm:$0xff] %v712
    %866 = vst [vmem:[#allocation7 + $0x1d0] sm:$0xff] %v714
    %867 = vst [vmem:[#allocation7 + $0x1d8] sm:$0xff] %v716
    %868 = vst [vmem:[#allocation7 + $0x1e0] sm:$0xff] %v720
    %869 = vst [vmem:[#allocation7 + $0x1e8] sm:$0xff] %v722
    %870 = vst [vmem:[#allocation7 + $0x1f0] sm:$0xff] %v724
    %871 = vst [vmem:[#allocation7 + $0x1f8] sm:$0xff] %v726
    %872 = vst [vmem:[#allocation7 + $0x200] sm:$0xff] %v730
    %873 = vst [vmem:[#allocation7 + $0x208] sm:$0xff] %v732
    %874 = vst [vmem:[#allocation7 + $0x210] sm:$0xff] %v734
    %875 = vst [vmem:[#allocation7 + $0x218] sm:$0xff] %v736
    %876 = vst [vmem:[#allocation7 + $0x220] sm:$0xff] %v740
    %877 = vst [vmem:[#allocation7 + $0x228] sm:$0xff] %v742
    %878 = vst [vmem:[#allocation7 + $0x230] sm:$0xff] %v744
    %879 = vst [vmem:[#allocation7 + $0x238] sm:$0xff] %v746
    %880 = vst [vmem:[#allocation7 + $0x240] sm:$0xff] %v750
    %881 = vst [vmem:[#allocation7 + $0x248] sm:$0xff] %v752
    %882 = vst [vmem:[#allocation7 + $0x250] sm:$0xff] %v754
    %883 = vst [vmem:[#allocation7 + $0x258] sm:$0xff] %v756
    %884 = vst [vmem:[#allocation7 + $0x260] sm:$0xff] %v760
    %885 = vst [vmem:[#allocation7 + $0x268] sm:$0xff] %v762
    %886 = vst [vmem:[#allocation7 + $0x270] sm:$0xff] %v764
    %887 = vst [vmem:[#allocation7 + $0x278] sm:$0xff] %v766
    %888 = vst [vmem:[#allocation7 + $0x280] sm:$0xff] %v770
    %889 = vst [vmem:[#allocation7 + $0x288] sm:$0xff] %v772
    %890 = vst [vmem:[#allocation7 + $0x290] sm:$0xff] %v774
    %891 = vst [vmem:[#allocation7 + $0x298] sm:$0xff] %v776
    %892 = vst [vmem:[#allocation7 + $0x2a0] sm:$0xff] %v780
    %893 = vst [vmem:[#allocation7 + $0x2a8] sm:$0xff] %v782
    %894 = vst [vmem:[#allocation7 + $0x2b0] sm:$0xff] %v784
    %895 = vst [vmem:[#allocation7 + $0x2b8] sm:$0xff] %v786
    %896 = vst [vmem:[#allocation7 + $0x2c0] sm:$0xff] %v790
    %897 = vst [vmem:[#allocation7 + $0x2c8] sm:$0xff] %v792
    %898 = vst [vmem:[#allocation7 + $0x2d0] sm:$0xff] %v794
    %899 = vst [vmem:[#allocation7 + $0x2d8] sm:$0xff] %v796
    %900 = vst [vmem:[#allocation7 + $0x2e0] sm:$0xff] %v800
    %901 = vst [vmem:[#allocation7 + $0x2e8] sm:$0xff] %v802
    %902 = vst [vmem:[#allocation7 + $0x2f0] sm:$0xff] %v804
    %903 = vst [vmem:[#allocation7 + $0x2f8] sm:$0xff] %v806
    // Predicated region
    $region22: #{tpu_custom_call.1} parent=1 // pred_check
      _
    $region23: #{tpu_custom_call.1} parent=1 // pred_check_branch
      %905 = sbr.rel (0) target = $region25
    $region24: #{tpu_custom_call.1} parent=1 // pred_region
      %s907 = ssub.s32 12288, 12288
      %908 = vsyncadd [#allocation4], %s907
      %s909 = sshll.u32 [#allocation7], 4
      %s910 = int_to_ptr.vmem [resolvable:$true] %s909
      %915 = dma.vmem_to_hbm [thread:$0]  %s910, 12288, %s3, [#allocation4], 256, 256, 16
    $region25: #{tpu_custom_call.1} parent=1 // pred_fallthru
      _
    // Predicated region
    $region26: #{tpu_custom_call.1} parent=1 // pred_check
      _
    $region27: #{tpu_custom_call.1} parent=1 // pred_check_branch
      %917 = sbr.rel (0) target = $region29
    $region28: #{tpu_custom_call.1} parent=1 // pred_region
      %918 = dma.done [#allocation4], 12288
    $region29: #{tpu_custom_call.1} parent=1 // pred_fallthru
      _
    %919 = vsyncpa [#allocation3], 1
    %920 = vsyncpa [#allocation6], 1
    %921 = vsyncpa [#allocation4], 1

</llo_original>
